<compile_context>
chip_gen: v7x
topology: tpu7x:2x2x1
jax: 0.10.0
libtpu: 0.0.40
codegen_flags: <defaults>
</compile_context>

<pallas_src>
import functools

import jax
import jax.numpy as jnp
from jax.experimental import pallas as pl
from jax.experimental.pallas import tpu as pltpu

LANE = 128  # TPU vreg lane width


# ----------------------------------------------------------------------------
# Fused Pallas kernel: conv1 -> ReLU -> conv2 -> ReLU -> conv3 for a block of B
# images.  Each 3x3 "same" conv is ONE MXU matmul:
#     im2row scratch (B*H, 3*WC)  @  banded weight (3*WC, W*Cout)
# ----------------------------------------------------------------------------
def _fused_cnn_kernel(x_ref, wb1_ref, b1_ref, wb2_ref, b2_ref, wb3_ref, b3_ref,
                      h1_ref, h2_ref, out_ref, xrow_ref, *, B, H, WC):
    # x_ref   : (B*H, WC)         lane-dense input rows for this block of B images
    # wbK_ref : (3*WC, W*CKout)   banded weights, 3 vertical taps concatenated along K (bf16)
    # bK_ref  : (1, W*CKout)      bias tiled across output columns (f32)
    # hK/out  : (B*H, W*CKout)    lane-dense outputs (f32)
    # xrow_ref: (B*H, 3*WC)       reused im2row scratch, bands [row i-1 | row i | row i+1]

    # Zero only the vertical-halo positions (first row of the dy=0 band and last row of
    # the dy=2 band of each image).  They are never overwritten below and the same
    # positions are halos for every conv, so no full-buffer memset is needed.
    zrow = jnp.zeros((1, WC), jnp.float32)
    for b in range(B):
        r0 = b * H
        xrow_ref[r0:r0 + 1, 0:WC] = zrow
        xrow_ref[r0 + H - 1:r0 + H, 2 * WC:3 * WC] = zrow

    def fill_im2row(act):                       # act: (B*H, WC) f32 value
        for b in range(B):
            r0 = b * H
            xrow_ref[r0:r0 + H, WC:2 * WC] = act[r0:r0 + H, :]               # dy = 1
            xrow_ref[r0 + 1:r0 + H, 0:WC] = act[r0:r0 + H - 1, :]            # dy = 0
            xrow_ref[r0:r0 + H - 1, 2 * WC:3 * WC] = act[r0 + 1:r0 + H, :]   # dy = 2

    def conv(wb_ref, b_ref):
        # ONE MXU matmul per 3x3 conv; K = 3*WC accumulates all 9 taps internally.
        # bf16 operands (more MXU throughput than f32), f32 accumulation + f32 bias.
        x_b = xrow_ref[...].astype(jnp.bfloat16)
        return jnp.dot(x_b, wb_ref[...],
                       preferred_element_type=jnp.float32) + b_ref[...]

    fill_im2row(x_ref[...])
    h1 = conv(wb1_ref, b1_ref)
    h1_ref[...] = h1.astype(h1_ref.dtype)       # forward hook on "conv1" (pre-ReLU)

    fill_im2row(jnp.maximum(h1, 0.0))           # nn.ReLU module (not hooked)
    h2 = conv(wb2_ref, b2_ref)
    h2_ref[...] = h2.astype(h2_ref.dtype)       # forward hook on "conv2" (pre-ReLU)

    fill_im2row(jnp.maximum(h2, 0.0))
    out_ref[...] = conv(wb3_ref, b3_ref).astype(out_ref.dtype)   # model output (Cout padded)


def _fused_cnn(x_rows, wb1, b1r, wb2, b2r, wb3, b3r, *, H, batch_block=None):
    """x_rows: (N*H, WC); wbK: (3*WC, W*CKout) bf16; bKr: (1, W*CKout) f32."""
    NH, WC = x_rows.shape
    N = NH // H
    WCo1, WCo2, WCo3 = wb1.shape[-1], wb2.shape[-1], wb3.shape[-1]
    # the single reused im2row scratch requires every conv *input* to be WC lanes wide
    assert wb1.shape[0] == 3 * WC and wb2.shape[0] == 3 * WC and wb3.shape[0] == 3 * WC
    assert WCo1 == WC and WCo2 == WC
    assert WC % LANE == 0 and WCo3 % LANE == 0 and H % 8 == 0

    # batch_block=None -> whole batch per grid step (best on single-TC v5e/v6e);
    # batch_block=1 -> one image per ("parallel") step, one per TensorCore on v7x.
    B = N if batch_block is None else batch_block
    assert N % B == 0
    num_blocks = N // B

    kernel = functools.partial(_fused_cnn_kernel, B=B, H=H, WC=WC)

    flops = int(2 * NH * 3 * WC * (WCo1 + WCo2 + WCo3))
    bytes_accessed = int(4 * x_rows.size
                         + 2 * (wb1.size + wb2.size + wb3.size)
                         + 4 * (b1r.size + b2r.size + b3r.size)
                         + 4 * NH * (WCo1 + WCo2 + WCo3))

    grid_spec = pltpu.PrefetchScalarGridSpec(
        num_scalar_prefetch=0,
        grid=(num_blocks,),
        in_specs=[
            pl.BlockSpec((B * H, WC), lambda n: (n, 0)),
            pl.BlockSpec(wb1.shape, lambda n: (0, 0)),   # constant across the grid
            pl.BlockSpec(b1r.shape, lambda n: (0, 0)),
            pl.BlockSpec(wb2.shape, lambda n: (0, 0)),
            pl.BlockSpec(b2r.shape, lambda n: (0, 0)),
            pl.BlockSpec(wb3.shape, lambda n: (0, 0)),
            pl.BlockSpec(b3r.shape, lambda n: (0, 0)),
        ],
        out_specs=[
            pl.BlockSpec((B * H, WCo1), lambda n: (n, 0)),
            pl.BlockSpec((B * H, WCo2), lambda n: (n, 0)),
            pl.BlockSpec((B * H, WCo3), lambda n: (n, 0)),
        ],
        scratch_shapes=[pltpu.VMEM((B * H, 3 * WC), jnp.float32)],
    )

    return pl.pallas_call(
        kernel,
        out_shape=(
            jax.ShapeDtypeStruct((NH, WCo1), jnp.float32),
            jax.ShapeDtypeStruct((NH, WCo2), jnp.float32),
            jax.ShapeDtypeStruct((NH, WCo3), jnp.float32),
        ),
        grid_spec=grid_spec,
        compiler_params=pltpu.CompilerParams(dimension_semantics=("parallel",)),
        cost_estimate=pl.CostEstimate(flops=flops, transcendentals=0,
                                      bytes_accessed=bytes_accessed),
    )(x_rows, wb1, b1r, wb2, b2r, wb3, b3r)


# ----------------------------------------------------------------------------
# Banded-weight construction — hoisted, runs ONCE per weight set (not per forward).
#   Wb[dy, jc*Cin + ci, j*Cout + co] = w[dy, jc - j + 1, ci, co]  if |jc - j| <= 1
# so a row-dot of the im2row band dy (input row i+dy-1, zero outside) against Wb[dy]
# reproduces the 3x3 "same" cross-correlation (PyTorch Conv2d) exactly.
# ----------------------------------------------------------------------------
def _banded_weights(w, W):
    KH, KW, Cin, Cout = w.shape
    jc = jnp.arange(W)[:, None]                       # input column
    j = jnp.arange(W)[None, :]                        # output column
    sel = ((jc - j + 1)[None, :, :] ==
           jnp.arange(KW)[:, None, None]).astype(w.dtype)        # (KW, W, W)
    wb = jnp.einsum("yxio,xaj->yaijo", w, sel)        # (KH, W, Cin, W, Cout)
    return wb.reshape(KH, W * Cin, W * Cout)


def prepare_packed_params(params, W):
    """Pad channels so every feature map is a multiple of 128 lanes wide, build banded
    weights with the 3 vertical taps concatenated along K, cast to bf16."""
    assert LANE % W == 0, "W must divide the 128-lane vreg width"
    unit = LANE // W
    cp = lambda c: -(-c // unit) * unit

    def pack(w, b):
        KH, KW, Cin, Cout = w.shape
        w = jnp.pad(w, ((0, 0), (0, 0), (0, cp(Cin) - Cin), (0, cp(Cout) - Cout)))
        b = jnp.pad(b, ((0, cp(Cout) - Cout),))
        wb = _banded_weights(w, W)                                   # (3, W*Cin_p, W*Cout_p)
        wb_cat = wb.reshape(wb.shape[0] * wb.shape[1], wb.shape[2]).astype(jnp.bfloat16)
        b_row = jnp.tile(b, W)[None, :].astype(jnp.float32)          # (1, W*Cout_p)
        return wb_cat, b_row

    wb1, b1r = pack(params["conv1.w"], params["conv1.b"])
    wb2, b2r = pack(params["conv2.w"], params["conv2.b"])
    wb3, b3r = pack(params["conv3.w"], params["conv3.b"])
    return {"wb1": wb1, "b1r": b1r, "wb2": wb2, "b2r": b2r, "wb3": wb3, "b3r": b3r}


# ----------------------------------------------------------------------------
# FeatureExtractor equivalent: fixed 3-conv model, "hooks" on conv1/conv2 outputs.
# ----------------------------------------------------------------------------
def _forward_impl(packed, x_nchw, *, H, W, cin, channels, layers, batch_block):
    c1, c2, c3 = channels
    unit = LANE // W
    cp = lambda c: -(-c // unit) * unit
    cin_p, c1p, c2p, c3p = cp(cin), cp(c1), cp(c2), cp(c3)

    N = x_nchw.shape[0]
    x = jnp.transpose(x_nchw, (0, 2, 3, 1)).astype(jnp.float32)     # NCHW -> NHWC
    x = jnp.pad(x, ((0, 0), (0, 0), (0, 0), (0, cin_p - cin)))      # zero channel pad
    x_rows = x.reshape(N * H, W * cin_p)                            # lane-dense rows

    h1r, h2r, outr = _fused_cnn(
        x_rows, packed["wb1"], packed["b1r"], packed["wb2"], packed["b2r"],
        packed["wb3"], packed["b3r"], H=H, batch_block=batch_block)

    def rows_to_nchw(t, cpad_, c):
        t = t.reshape(N, H, W, cpad_)[..., :c]                      # drop padded channels
        return jnp.transpose(t, (0, 3, 1, 2))

    captured = {"conv1": rows_to_nchw(h1r, c1p, c1),
                "conv2": rows_to_nchw(h2r, c2p, c2)}
    features = {k: captured[k] for k in layers}
    return features, rows_to_nchw(outr, c3p, c3)


class FeatureExtractor:
    """JAX/Pallas analogue of FeatureExtractor(model, layers): forward(x) returns
    ({layer_name: activation}, model_output), NCHW convention like PyTorch."""

    def __init__(self, params, layers=("conv1", "conv2"), *, H, W, batch_block=None):
        assert set(layers) <= {"conv1", "conv2"}, "hookable layers: conv1, conv2"
        self.layers = tuple(layers)
        # Hoisted preprocessing: banded weights / tiled biases built once per weight set.
        self.packed = prepare_packed_params(params, W)
        channels = (params["conv1.w"].shape[-1], params["conv2.w"].shape[-1],
                    params["conv3.w"].shape[-1])
        cin = params["conv1.w"].shape[-2]
        self._fwd = jax.jit(functools.partial(
            _forward_impl, H=H, W=W, cin=cin, channels=channels,
            layers=self.layers, batch_block=batch_block))

    def __call__(self, x_nchw):
        return self._fwd(self.packed, x_nchw)


# ----------------------------------------------------------------------------
# Synthetic wrapped model params + plain-XLA reference for a sanity check
# ----------------------------------------------------------------------------
def init_params(key, cin=4, c1=8, c2=8, cout=4):
    """Fan-in scaled init; weights stored as (3,3,Cin,Cout) (HWIO)."""
    ks = jax.random.split(key, 6)

    def conv_init(kw, kb, cin_, cout_):
        bound = 1.0 / jnp.sqrt(cin_ * 9.0)
        w = jax.random.uniform(kw, (3, 3, cin_, cout_), jnp.float32, -bound, bound)
        b = jax.random.uniform(kb, (cout_,), jnp.float32, -bound, bound)
        return w, b

    p = {}
    p["conv1.w"], p["conv1.b"] = conv_init(ks[0], ks[1], cin, c1)
    p["conv2.w"], p["conv2.b"] = conv_init(ks[2], ks[3], c1, c2)
    p["conv3.w"], p["conv3.b"] = conv_init(ks[4], ks[5], c2, cout)
    return p


def _reference_forward(params, x_nchw):
    x = jnp.transpose(x_nchw, (0, 2, 3, 1)).astype(jnp.float32)

    def conv(v, w, b):
        y = jax.lax.conv_general_dilated(
            v, w, window_strides=(1, 1), padding="SAME",
            dimension_numbers=("NHWC", "HWIO", "NHWC"))
        return y + b

    h1 = conv(x, params["conv1.w"], params["conv1.b"])
    h2 = conv(jnp.maximum(h1, 0.0), params["conv2.w"], params["conv2.b"])
    out = conv(jnp.maximum(h2, 0.0), params["conv3.w"], params["conv3.b"])
    t = lambda v: jnp.transpose(v, (0, 3, 1, 2))
    return {"conv1": t(h1), "conv2": t(h2)}, t(out)


if __name__ == "__main__":
    key = jax.random.PRNGKey(0)
    pkey, xkey = jax.random.split(key)

    N, C, H, W = 2, 4, 16, 16
    x = jax.random.normal(xkey, (N, C, H, W), jnp.float32)        # NCHW, like PyTorch
    params = init_params(pkey, cin=C, c1=8, c2=8, cout=C)

    # Default batch_block=None: whole batch in one grid step (M = N*H = 32 per matmul),
    # best on single-TensorCore v5e/v6e.  On v7x pass batch_block=1 for one image per TC.
    extractor = FeatureExtractor(params, layers=("conv1", "conv2"), H=H, W=W)

    features, output = extractor(x)
    jax.block_until_ready((features, output))

    assert features["conv1"].shape == (N, 8, H, W)
    assert features["conv2"].shape == (N, 8, H, W)
    assert output.shape == (N, C, H, W)

    # numerical sanity check vs plain-XLA convs (loose tol: the kernel feeds the MXU
    # bf16 operands with f32 accumulation)
    ref_feats, ref_out = _reference_forward(params, x)
    for k in ("conv1", "conv2"):
        assert float(jnp.max(jnp.abs(features[k] - ref_feats[k]))) < 1e-1
    assert float(jnp.max(jnp.abs(output - ref_out))) < 1e-1

    print("KERNEL_OK")
</pallas_src>

<mosaic_0001>
module attributes {stable_mosaic.version = 11 : i64} {
  func.func @_fused_cnn_kernel(%arg0: i32, %arg1: memref<32x128xf32, #tpu.memory_space<vmem>>, %arg2: memref<384x128xbf16, #tpu.memory_space<vmem>>, %arg3: memref<1x128xf32, #tpu.memory_space<vmem>>, %arg4: memref<384x128xbf16, #tpu.memory_space<vmem>>, %arg5: memref<1x128xf32, #tpu.memory_space<vmem>>, %arg6: memref<384x128xbf16, #tpu.memory_space<vmem>>, %arg7: memref<1x128xf32, #tpu.memory_space<vmem>>, %arg8: memref<32x128xf32, #tpu.memory_space<vmem>>, %arg9: memref<32x128xf32, #tpu.memory_space<vmem>>, %arg10: memref<32x128xf32, #tpu.memory_space<vmem>>, %arg11: memref<32x384xf32, #tpu.memory_space<vmem>>) attributes {dimension_semantics = [#tpu.dimension_semantics<parallel>], iteration_bounds = array<i64: 1>, scalar_prefetch = 0 : i64, scratch_operands = 1 : i64, tpu.core_type = #tpu.core_type<tc>, window_params = [{transform_indices = @transform_0, window_bounds = array<i64: 32, 128>}, {pipeline_mode = #tpu.pipeline_mode<synchronous>, transform_indices = @transform_1, window_bounds = array<i64: 384, 128>}, {pipeline_mode = #tpu.pipeline_mode<synchronous>, transform_indices = @transform_2, window_bounds = array<i64: 1, 128>}, {pipeline_mode = #tpu.pipeline_mode<synchronous>, transform_indices = @transform_3, window_bounds = array<i64: 384, 128>}, {pipeline_mode = #tpu.pipeline_mode<synchronous>, transform_indices = @transform_4, window_bounds = array<i64: 1, 128>}, {pipeline_mode = #tpu.pipeline_mode<synchronous>, transform_indices = @transform_5, window_bounds = array<i64: 384, 128>}, {pipeline_mode = #tpu.pipeline_mode<synchronous>, transform_indices = @transform_6, window_bounds = array<i64: 1, 128>}, {transform_indices = @transform_7, window_bounds = array<i64: 32, 128>}, {transform_indices = @transform_8, window_bounds = array<i64: 32, 128>}, {transform_indices = @transform_9, window_bounds = array<i64: 32, 128>}]} {
    %cst = arith.constant 0.000000e+00 : f32
    %0 = vector.broadcast %cst : f32 to vector<1x128xf32>
    %c0 = arith.constant 0 : index
    %c0_0 = arith.constant 0 : index
    %1 = vector.load %arg11[%c0, %c0_0] : memref<32x384xf32, #tpu.memory_space<vmem>>, vector<1x128xf32>
    tpu.vector_store %arg11[%c0, %c0_0], %0 {strides = array<i32>} : memref<32x384xf32, #tpu.memory_space<vmem>>, vector<1x128xf32>,
    %c15 = arith.constant 15 : index
    %c256 = arith.constant 256 : index
    %2 = vector.load %arg11[%c15, %c256] : memref<32x384xf32, #tpu.memory_space<vmem>>, vector<1x128xf32>
    tpu.vector_store %arg11[%c15, %c256], %0 {strides = array<i32>} : memref<32x384xf32, #tpu.memory_space<vmem>>, vector<1x128xf32>,
    %c16 = arith.constant 16 : index
    %c0_1 = arith.constant 0 : index
    %3 = vector.load %arg11[%c16, %c0_1] : memref<32x384xf32, #tpu.memory_space<vmem>>, vector<1x128xf32>
    tpu.vector_store %arg11[%c16, %c0_1], %0 {strides = array<i32>} : memref<32x384xf32, #tpu.memory_space<vmem>>, vector<1x128xf32>,
    %c31 = arith.constant 31 : index
    %c256_2 = arith.constant 256 : index
    %4 = vector.load %arg11[%c31, %c256_2] : memref<32x384xf32, #tpu.memory_space<vmem>>, vector<1x128xf32>
    tpu.vector_store %arg11[%c31, %c256_2], %0 {strides = array<i32>} : memref<32x384xf32, #tpu.memory_space<vmem>>, vector<1x128xf32>,
    %c0_3 = arith.constant 0 : index
    %c0_4 = arith.constant 0 : index
    %5 = vector.load %arg1[%c0_3, %c0_4] : memref<32x128xf32, #tpu.memory_space<vmem>>, vector<32x128xf32>
    %6 = vector.extract_strided_slice %5 {offsets = [0, 0], sizes = [16, 128], strides = [1, 1]} : vector<32x128xf32> to vector<16x128xf32>
    %c0_5 = arith.constant 0 : index
    %c128 = arith.constant 128 : index
    %7 = vector.load %arg11[%c0_5, %c128] : memref<32x384xf32, #tpu.memory_space<vmem>>, vector<16x128xf32>
    tpu.vector_store %arg11[%c0_5, %c128], %6 {strides = array<i32>} : memref<32x384xf32, #tpu.memory_space<vmem>>, vector<16x128xf32>,
    %8 = vector.extract_strided_slice %5 {offsets = [0, 0], sizes = [15, 128], strides = [1, 1]} : vector<32x128xf32> to vector<15x128xf32>
    %c1 = arith.constant 1 : index
    %c0_6 = arith.constant 0 : index
    %9 = vector.load %arg11[%c1, %c0_6] : memref<32x384xf32, #tpu.memory_space<vmem>>, vector<15x128xf32>
    tpu.vector_store %arg11[%c1, %c0_6], %8 {strides = array<i32>} : memref<32x384xf32, #tpu.memory_space<vmem>>, vector<15x128xf32>,
    %10 = vector.extract_strided_slice %5 {offsets = [1, 0], sizes = [15, 128], strides = [1, 1]} : vector<32x128xf32> to vector<15x128xf32>
    %c0_7 = arith.constant 0 : index
    %c256_8 = arith.constant 256 : index
    %11 = vector.load %arg11[%c0_7, %c256_8] : memref<32x384xf32, #tpu.memory_space<vmem>>, vector<15x128xf32>
    tpu.vector_store %arg11[%c0_7, %c256_8], %10 {strides = array<i32>} : memref<32x384xf32, #tpu.memory_space<vmem>>, vector<15x128xf32>,
    %12 = vector.extract_strided_slice %5 {offsets = [16, 0], sizes = [16, 128], strides = [1, 1]} : vector<32x128xf32> to vector<16x128xf32>
    %c16_9 = arith.constant 16 : index
    %c128_10 = arith.constant 128 : index
    %13 = vector.load %arg11[%c16_9, %c128_10] : memref<32x384xf32, #tpu.memory_space<vmem>>, vector<16x128xf32>
    tpu.vector_store %arg11[%c16_9, %c128_10], %12 {strides = array<i32>} : memref<32x384xf32, #tpu.memory_space<vmem>>, vector<16x128xf32>,
    %14 = vector.extract_strided_slice %5 {offsets = [16, 0], sizes = [15, 128], strides = [1, 1]} : vector<32x128xf32> to vector<15x128xf32>
    %c17 = arith.constant 17 : index
    %c0_11 = arith.constant 0 : index
    %15 = vector.load %arg11[%c17, %c0_11] : memref<32x384xf32, #tpu.memory_space<vmem>>, vector<15x128xf32>
    tpu.vector_store %arg11[%c17, %c0_11], %14 {strides = array<i32>} : memref<32x384xf32, #tpu.memory_space<vmem>>, vector<15x128xf32>,
    %16 = vector.extract_strided_slice %5 {offsets = [17, 0], sizes = [15, 128], strides = [1, 1]} : vector<32x128xf32> to vector<15x128xf32>
    %c16_12 = arith.constant 16 : index
    %c256_13 = arith.constant 256 : index
    %17 = vector.load %arg11[%c16_12, %c256_13] : memref<32x384xf32, #tpu.memory_space<vmem>>, vector<15x128xf32>
    tpu.vector_store %arg11[%c16_12, %c256_13], %16 {strides = array<i32>} : memref<32x384xf32, #tpu.memory_space<vmem>>, vector<15x128xf32>,
    %c0_14 = arith.constant 0 : index
    %c0_15 = arith.constant 0 : index
    %18 = vector.load %arg11[%c0_14, %c0_15] : memref<32x384xf32, #tpu.memory_space<vmem>>, vector<32x384xf32>
    %19 = arith.truncf %18 : vector<32x384xf32> to vector<32x384xbf16>
    %c0_16 = arith.constant 0 : index
    %c0_17 = arith.constant 0 : index
    %20 = vector.load %arg2[%c0_16, %c0_17] : memref<384x128xbf16, #tpu.memory_space<vmem>>, vector<384x128xbf16>
    %cst_18 = arith.constant dense<0.000000e+00> : vector<32x128xf32>
    %21 = tpu.matmul %19, %20, %cst_18 {dimension_numbers = #tpu.dot_dimension_numbers<[1], [0], [0], [1], [0, 0, 1, 1], [], []>} : vector<32x384xbf16>, vector<384x128xbf16>, vector<32x128xf32> -> vector<32x128xf32>
    %c0_19 = arith.constant 0 : index
    %c0_20 = arith.constant 0 : index
    %22 = vector.load %arg3[%c0_19, %c0_20] : memref<1x128xf32, #tpu.memory_space<vmem>>, vector<1x128xf32>
    %23 = vector.broadcast %22 : vector<1x128xf32> to vector<32x128xf32>
    %24 = arith.addf %21, %23 : vector<32x128xf32>
    %c0_21 = arith.constant 0 : index
    %c0_22 = arith.constant 0 : index
    %25 = vector.load %arg8[%c0_21, %c0_22] : memref<32x128xf32, #tpu.memory_space<vmem>>, vector<32x128xf32>
    tpu.vector_store %arg8[%c0_21, %c0_22], %24 {strides = array<i32>} : memref<32x128xf32, #tpu.memory_space<vmem>>, vector<32x128xf32>,
    %cst_23 = arith.constant 0.000000e+00 : f32
    %26 = vector.broadcast %cst_23 : f32 to vector<32x128xf32>
    %27 = arith.maximumf %24, %26 : vector<32x128xf32>
    %28 = vector.extract_strided_slice %27 {offsets = [0, 0], sizes = [16, 128], strides = [1, 1]} : vector<32x128xf32> to vector<16x128xf32>
    %c0_24 = arith.constant 0 : index
    %c128_25 = arith.constant 128 : index
    %29 = vector.load %arg11[%c0_24, %c128_25] : memref<32x384xf32, #tpu.memory_space<vmem>>, vector<16x128xf32>
    tpu.vector_store %arg11[%c0_24, %c128_25], %28 {strides = array<i32>} : memref<32x384xf32, #tpu.memory_space<vmem>>, vector<16x128xf32>,
    %30 = vector.extract_strided_slice %27 {offsets = [0, 0], sizes = [15, 128], strides = [1, 1]} : vector<32x128xf32> to vector<15x128xf32>
    %c1_26 = arith.constant 1 : index
    %c0_27 = arith.constant 0 : index
    %31 = vector.load %arg11[%c1_26, %c0_27] : memref<32x384xf32, #tpu.memory_space<vmem>>, vector<15x128xf32>
    tpu.vector_store %arg11[%c1_26, %c0_27], %30 {strides = array<i32>} : memref<32x384xf32, #tpu.memory_space<vmem>>, vector<15x128xf32>,
    %32 = vector.extract_strided_slice %27 {offsets = [1, 0], sizes = [15, 128], strides = [1, 1]} : vector<32x128xf32> to vector<15x128xf32>
    %c0_28 = arith.constant 0 : index
    %c256_29 = arith.constant 256 : index
    %33 = vector.load %arg11[%c0_28, %c256_29] : memref<32x384xf32, #tpu.memory_space<vmem>>, vector<15x128xf32>
    tpu.vector_store %arg11[%c0_28, %c256_29], %32 {strides = array<i32>} : memref<32x384xf32, #tpu.memory_space<vmem>>, vector<15x128xf32>,
    %34 = vector.extract_strided_slice %27 {offsets = [16, 0], sizes = [16, 128], strides = [1, 1]} : vector<32x128xf32> to vector<16x128xf32>
    %c16_30 = arith.constant 16 : index
    %c128_31 = arith.constant 128 : index
    %35 = vector.load %arg11[%c16_30, %c128_31] : memref<32x384xf32, #tpu.memory_space<vmem>>, vector<16x128xf32>
    tpu.vector_store %arg11[%c16_30, %c128_31], %34 {strides = array<i32>} : memref<32x384xf32, #tpu.memory_space<vmem>>, vector<16x128xf32>,
    %36 = vector.extract_strided_slice %27 {offsets = [16, 0], sizes = [15, 128], strides = [1, 1]} : vector<32x128xf32> to vector<15x128xf32>
    %c17_32 = arith.constant 17 : index
    %c0_33 = arith.constant 0 : index
    %37 = vector.load %arg11[%c17_32, %c0_33] : memref<32x384xf32, #tpu.memory_space<vmem>>, vector<15x128xf32>
    tpu.vector_store %arg11[%c17_32, %c0_33], %36 {strides = array<i32>} : memref<32x384xf32, #tpu.memory_space<vmem>>, vector<15x128xf32>,
    %38 = vector.extract_strided_slice %27 {offsets = [17, 0], sizes = [15, 128], strides = [1, 1]} : vector<32x128xf32> to vector<15x128xf32>
    %c16_34 = arith.constant 16 : index
    %c256_35 = arith.constant 256 : index
    %39 = vector.load %arg11[%c16_34, %c256_35] : memref<32x384xf32, #tpu.memory_space<vmem>>, vector<15x128xf32>
    tpu.vector_store %arg11[%c16_34, %c256_35], %38 {strides = array<i32>} : memref<32x384xf32, #tpu.memory_space<vmem>>, vector<15x128xf32>,
    %c0_36 = arith.constant 0 : index
    %c0_37 = arith.constant 0 : index
    %40 = vector.load %arg11[%c0_36, %c0_37] : memref<32x384xf32, #tpu.memory_space<vmem>>, vector<32x384xf32>
    %41 = arith.truncf %40 : vector<32x384xf32> to vector<32x384xbf16>
    %c0_38 = arith.constant 0 : index
    %c0_39 = arith.constant 0 : index
    %42 = vector.load %arg4[%c0_38, %c0_39] : memref<384x128xbf16, #tpu.memory_space<vmem>>, vector<384x128xbf16>
    %cst_40 = arith.constant dense<0.000000e+00> : vector<32x128xf32>
    %43 = tpu.matmul %41, %42, %cst_40 {dimension_numbers = #tpu.dot_dimension_numbers<[1], [0], [0], [1], [0, 0, 1, 1], [], []>} : vector<32x384xbf16>, vector<384x128xbf16>, vector<32x128xf32> -> vector<32x128xf32>
    %c0_41 = arith.constant 0 : index
    %c0_42 = arith.constant 0 : index
    %44 = vector.load %arg5[%c0_41, %c0_42] : memref<1x128xf32, #tpu.memory_space<vmem>>, vector<1x128xf32>
    %45 = vector.broadcast %44 : vector<1x128xf32> to vector<32x128xf32>
    %46 = arith.addf %43, %45 : vector<32x128xf32>
    %c0_43 = arith.constant 0 : index
    %c0_44 = arith.constant 0 : index
    %47 = vector.load %arg9[%c0_43, %c0_44] : memref<32x128xf32, #tpu.memory_space<vmem>>, vector<32x128xf32>
    tpu.vector_store %arg9[%c0_43, %c0_44], %46 {strides = array<i32>} : memref<32x128xf32, #tpu.memory_space<vmem>>, vector<32x128xf32>,
    %cst_45 = arith.constant 0.000000e+00 : f32
    %48 = vector.broadcast %cst_45 : f32 to vector<32x128xf32>
    %49 = arith.maximumf %46, %48 : vector<32x128xf32>
    %50 = vector.extract_strided_slice %49 {offsets = [0, 0], sizes = [16, 128], strides = [1, 1]} : vector<32x128xf32> to vector<16x128xf32>
    %c0_46 = arith.constant 0 : index
    %c128_47 = arith.constant 128 : index
    %51 = vector.load %arg11[%c0_46, %c128_47] : memref<32x384xf32, #tpu.memory_space<vmem>>, vector<16x128xf32>
    tpu.vector_store %arg11[%c0_46, %c128_47], %50 {strides = array<i32>} : memref<32x384xf32, #tpu.memory_space<vmem>>, vector<16x128xf32>,
    %52 = vector.extract_strided_slice %49 {offsets = [0, 0], sizes = [15, 128], strides = [1, 1]} : vector<32x128xf32> to vector<15x128xf32>
    %c1_48 = arith.constant 1 : index
    %c0_49 = arith.constant 0 : index
    %53 = vector.load %arg11[%c1_48, %c0_49] : memref<32x384xf32, #tpu.memory_space<vmem>>, vector<15x128xf32>
    tpu.vector_store %arg11[%c1_48, %c0_49], %52 {strides = array<i32>} : memref<32x384xf32, #tpu.memory_space<vmem>>, vector<15x128xf32>,
    %54 = vector.extract_strided_slice %49 {offsets = [1, 0], sizes = [15, 128], strides = [1, 1]} : vector<32x128xf32> to vector<15x128xf32>
    %c0_50 = arith.constant 0 : index
    %c256_51 = arith.constant 256 : index
    %55 = vector.load %arg11[%c0_50, %c256_51] : memref<32x384xf32, #tpu.memory_space<vmem>>, vector<15x128xf32>
    tpu.vector_store %arg11[%c0_50, %c256_51], %54 {strides = array<i32>} : memref<32x384xf32, #tpu.memory_space<vmem>>, vector<15x128xf32>,
    %56 = vector.extract_strided_slice %49 {offsets = [16, 0], sizes = [16, 128], strides = [1, 1]} : vector<32x128xf32> to vector<16x128xf32>
    %c16_52 = arith.constant 16 : index
    %c128_53 = arith.constant 128 : index
    %57 = vector.load %arg11[%c16_52, %c128_53] : memref<32x384xf32, #tpu.memory_space<vmem>>, vector<16x128xf32>
    tpu.vector_store %arg11[%c16_52, %c128_53], %56 {strides = array<i32>} : memref<32x384xf32, #tpu.memory_space<vmem>>, vector<16x128xf32>,
    %58 = vector.extract_strided_slice %49 {offsets = [16, 0], sizes = [15, 128], strides = [1, 1]} : vector<32x128xf32> to vector<15x128xf32>
    %c17_54 = arith.constant 17 : index
    %c0_55 = arith.constant 0 : index
    %59 = vector.load %arg11[%c17_54, %c0_55] : memref<32x384xf32, #tpu.memory_space<vmem>>, vector<15x128xf32>
    tpu.vector_store %arg11[%c17_54, %c0_55], %58 {strides = array<i32>} : memref<32x384xf32, #tpu.memory_space<vmem>>, vector<15x128xf32>,
    %60 = vector.extract_strided_slice %49 {offsets = [17, 0], sizes = [15, 128], strides = [1, 1]} : vector<32x128xf32> to vector<15x128xf32>
    %c16_56 = arith.constant 16 : index
    %c256_57 = arith.constant 256 : index
    %61 = vector.load %arg11[%c16_56, %c256_57] : memref<32x384xf32, #tpu.memory_space<vmem>>, vector<15x128xf32>
    tpu.vector_store %arg11[%c16_56, %c256_57], %60 {strides = array<i32>} : memref<32x384xf32, #tpu.memory_space<vmem>>, vector<15x128xf32>,
    %c0_58 = arith.constant 0 : index
    %c0_59 = arith.constant 0 : index
    %62 = vector.load %arg11[%c0_58, %c0_59] : memref<32x384xf32, #tpu.memory_space<vmem>>, vector<32x384xf32>
    %63 = arith.truncf %62 : vector<32x384xf32> to vector<32x384xbf16>
    %c0_60 = arith.constant 0 : index
    %c0_61 = arith.constant 0 : index
    %64 = vector.load %arg6[%c0_60, %c0_61] : memref<384x128xbf16, #tpu.memory_space<vmem>>, vector<384x128xbf16>
    %cst_62 = arith.constant dense<0.000000e+00> : vector<32x128xf32>
    %65 = tpu.matmul %63, %64, %cst_62 {dimension_numbers = #tpu.dot_dimension_numbers<[1], [0], [0], [1], [0, 0, 1, 1], [], []>} : vector<32x384xbf16>, vector<384x128xbf16>, vector<32x128xf32> -> vector<32x128xf32>
    %c0_63 = arith.constant 0 : index
    %c0_64 = arith.constant 0 : index
    %66 = vector.load %arg7[%c0_63, %c0_64] : memref<1x128xf32, #tpu.memory_space<vmem>>, vector<1x128xf32>
    %67 = vector.broadcast %66 : vector<1x128xf32> to vector<32x128xf32>
    %68 = arith.addf %65, %67 : vector<32x128xf32>
    %c0_65 = arith.constant 0 : index
    %c0_66 = arith.constant 0 : index
    %69 = vector.load %arg10[%c0_65, %c0_66] : memref<32x128xf32, #tpu.memory_space<vmem>>, vector<32x128xf32>
    tpu.vector_store %arg10[%c0_65, %c0_66], %68 {strides = array<i32>} : memref<32x128xf32, #tpu.memory_space<vmem>>, vector<32x128xf32>,
    return
  }
  func.func @transform_0(%arg0: i32) -> (i32, i32) {
    %c0_i32 = arith.constant 0 : i32
    %c0_i32_0 = arith.constant 0 : i32
    return %arg0, %c0_i32 : i32, i32
  }
  func.func @transform_1(%arg0: i32) -> (i32, i32) {
    %c0_i32 = arith.constant 0 : i32
    %c0_i32_0 = arith.constant 0 : i32
    %c0_i32_1 = arith.constant 0 : i32
    return %c0_i32, %c0_i32_0 : i32, i32
  }
  func.func @transform_2(%arg0: i32) -> (i32, i32) {
    %c0_i32 = arith.constant 0 : i32
    %c0_i32_0 = arith.constant 0 : i32
    %c0_i32_1 = arith.constant 0 : i32
    return %c0_i32, %c0_i32_0 : i32, i32
  }
  func.func @transform_3(%arg0: i32) -> (i32, i32) {
    %c0_i32 = arith.constant 0 : i32
    %c0_i32_0 = arith.constant 0 : i32
    %c0_i32_1 = arith.constant 0 : i32
    return %c0_i32, %c0_i32_0 : i32, i32
  }
  func.func @transform_4(%arg0: i32) -> (i32, i32) {
    %c0_i32 = arith.constant 0 : i32
    %c0_i32_0 = arith.constant 0 : i32
    %c0_i32_1 = arith.constant 0 : i32
    return %c0_i32, %c0_i32_0 : i32, i32
  }
  func.func @transform_5(%arg0: i32) -> (i32, i32) {
    %c0_i32 = arith.constant 0 : i32
    %c0_i32_0 = arith.constant 0 : i32
    %c0_i32_1 = arith.constant 0 : i32
    return %c0_i32, %c0_i32_0 : i32, i32
  }
  func.func @transform_6(%arg0: i32) -> (i32, i32) {
    %c0_i32 = arith.constant 0 : i32
    %c0_i32_0 = arith.constant 0 : i32
    %c0_i32_1 = arith.constant 0 : i32
    return %c0_i32, %c0_i32_0 : i32, i32
  }
  func.func @transform_7(%arg0: i32) -> (i32, i32) {
    %c0_i32 = arith.constant 0 : i32
    %c0_i32_0 = arith.constant 0 : i32
    return %arg0, %c0_i32 : i32, i32
  }
  func.func @transform_8(%arg0: i32) -> (i32, i32) {
    %c0_i32 = arith.constant 0 : i32
    %c0_i32_0 = arith.constant 0 : i32
    return %arg0, %c0_i32 : i32, i32
  }
  func.func @transform_9(%arg0: i32) -> (i32, i32) {
    %c0_i32 = arith.constant 0 : i32
    %c0_i32_0 = arith.constant 0 : i32
    return %arg0, %c0_i32 : i32, i32
  }
}

</mosaic_0001>

<llo_original>
// kernel: _forward_impl.1
$region0: #{_forward_impl.1}
  #allocation0 [shape = 'u32[]', space=smem, size = 0x4, offset = 0x4, fixed_abs, tag = 'smem constant byte address 0x4 - core index']
  #allocation1 [shape = 'u32[144,128]{1,0:T(1,128)}', space=vmem, size = 0x12000, scoped, tag = 'internal scratch']
  #allocation2 [shape = 'f32[32,384]{1,0:T(8,128)}', space=vmem, size = 0xc000, scoped, tag = 'scratch operand']
  %s0 = inlined_call_operand.vmem [shape: f32[32,128], index: 0, kind: input, shape index: {}]
  %s1 = inlined_call_operand.vmem [shape: bf16[384,128], index: 1, kind: input, shape index: {}]
  %s2 = inlined_call_operand.vmem [shape: f32[1,128], index: 2, kind: input, shape index: {}]
  %s3 = inlined_call_operand.vmem [shape: bf16[384,128], index: 3, kind: input, shape index: {}]
  %s4 = inlined_call_operand.vmem [shape: f32[1,128], index: 4, kind: input, shape index: {}]
  %s5 = inlined_call_operand.vmem [shape: bf16[384,128], index: 5, kind: input, shape index: {}]
  %s6 = inlined_call_operand.vmem [shape: f32[1,128], index: 6, kind: input, shape index: {}]
  %s7 = inlined_call_operand.vmem [shape: f32[32,128], index: 7, kind: output, shape index: {0}]
  %s8 = inlined_call_operand.vmem [shape: f32[32,128], index: 8, kind: output, shape index: {1}]
  %s9 = inlined_call_operand.vmem [shape: f32[32,128], index: 9, kind: output, shape index: {2}]
  %10 = xla_tuple %s7, %s8, %s9
  %s11 = sld [smem:[#allocation0]]
  $region54: #{_forward_impl.1} parent=0
    _
  %s13 = ssub.s32 1, %s11
  %s14 = scalar_select 0, %s13, %s11
  // Predicated region
  $region2: #{_forward_impl.1} parent=0 // pred_check
    _
  $region3: #{_forward_impl.1} parent=0 // pred_check_branch
    %16 = sbr.rel (0) target = $region5
  $region4: #{_forward_impl.1} parent=0 // pred_region
    _
  $region5: #{_forward_impl.1} parent=0 // pred_fallthru
    _
  // Predicated region
  $region6: #{_forward_impl.1} parent=0 // pred_check
    _
  $region7: #{_forward_impl.1} parent=0 // pred_check_branch
    %18 = sbr.rel (0) target = $region9
  $region8: #{_forward_impl.1} parent=0 // pred_region
    _
  $region9: #{_forward_impl.1} parent=0 // pred_fallthru
    _
  // Predicated region
  $region10: #{_forward_impl.1} parent=0 // pred_check
    _
  $region11: #{_forward_impl.1} parent=0 // pred_check_branch
    %20 = sbr.rel (0) target = $region13
  $region12: #{_forward_impl.1} parent=0 // pred_region
    _
  $region13: #{_forward_impl.1} parent=0 // pred_fallthru
    _
  // Predicated region
  $region14: #{_forward_impl.1} parent=0 // pred_check
    _
  $region15: #{_forward_impl.1} parent=0 // pred_check_branch
    %22 = sbr.rel (0) target = $region17
  $region16: #{_forward_impl.1} parent=0 // pred_region
    _
  $region17: #{_forward_impl.1} parent=0 // pred_fallthru
    _
  // Predicated region
  $region18: #{_forward_impl.1} parent=0 // pred_check
    _
  $region19: #{_forward_impl.1} parent=0 // pred_check_branch
    %24 = sbr.rel (0) target = $region21
  $region20: #{_forward_impl.1} parent=0 // pred_region
    _
  $region21: #{_forward_impl.1} parent=0 // pred_fallthru
    _
  // Predicated region
  $region22: #{_forward_impl.1} parent=0 // pred_check
    _
  $region23: #{_forward_impl.1} parent=0 // pred_check_branch
    %26 = sbr.rel (0) target = $region25
  $region24: #{_forward_impl.1} parent=0 // pred_region
    _
  $region25: #{_forward_impl.1} parent=0 // pred_fallthru
    _
  // Predicated region
  $region26: #{_forward_impl.1} parent=0 // pred_check
    _
  $region27: #{_forward_impl.1} parent=0 // pred_check_branch
    %28 = sbr.rel (0) target = $region29
  $region28: #{_forward_impl.1} parent=0 // pred_region
    _
  $region29: #{_forward_impl.1} parent=0 // pred_fallthru
    _
  %30 = vst [vmem:[#allocation2] sm:$0x1] 0.0
  %31 = vst [vmem:[#allocation2 + $0x2f] sm:$0x1] 0.0
  %32 = vst [vmem:[#allocation2 + $0x30] sm:$0x1] 0.0
  %33 = vst [vmem:[#allocation2 + $0x5f] sm:$0x1] 0.0
  %v34 = vld [vmem:[%s0] sm:$0xff]
  %v35 = vld [vmem:[%s0 + $0x8] sm:$0xff]
  %v36 = vld [vmem:[%s0 + $0x10] sm:$0xff]
  %v37 = vld [vmem:[%s0 + $0x18] sm:$0xff]
  %38 = vst [vmem:[#allocation2 + $0x8] sm:$0xff] %v34
  %39 = vst [vmem:[#allocation2 + $0x20] sm:$0xff] %v35
  %vm42 = vcmask 1040384
  %v43 = vrot.slane %v34, 7
  %v44 = vrot.slane %v35, 7
  %v45 = vsel %vm42, %v43, %v44
  %48 = vst [vmem:[#allocation2] sm:$0xfe] %v43
  %49 = vst [vmem:[#allocation2 + $0x18] sm:$0xff] %v45
  %vm50 = vcmask 1046528
  %v51 = vrot.slane %v34, 1
  %v52 = vrot.slane %v35, 1
  %v53 = vsel %vm50, %v51, %v52
  %56 = vst [vmem:[#allocation2 + $0x10] sm:$0xff] %v53
  %57 = vst [vmem:[#allocation2 + $0x28] sm:$0x7f] %v52
  %58 = vst [vmem:[#allocation2 + $0x38] sm:$0xff] %v36
  %59 = vst [vmem:[#allocation2 + $0x50] sm:$0xff] %v37
  %v62 = vrot.slane %v36, 7
  %v63 = vrot.slane %v37, 7
  %v64 = vsel %vm42, %v62, %v63
  %67 = vst [vmem:[#allocation2 + $0x30] sm:$0xfe] %v62
  %68 = vst [vmem:[#allocation2 + $0x48] sm:$0xff] %v64
  %v69 = vrot.slane %v36, 1
  %v70 = vrot.slane %v37, 1
  %v71 = vsel %vm50, %v69, %v70
  %74 = vst [vmem:[#allocation2 + $0x40] sm:$0xff] %v71
  %75 = vst [vmem:[#allocation2 + $0x58] sm:$0x7f] %v70
  %v76 = vld [vmem:[#allocation2] sm:$0xff]
  %v77 = vld [vmem:[#allocation2 + $0x8] sm:$0xff]
  %v78 = vld [vmem:[#allocation2 + $0x10] sm:$0xff]
  %v79 = vld [vmem:[#allocation2 + $0x18] sm:$0xff]
  %v80 = vld [vmem:[#allocation2 + $0x20] sm:$0xff]
  %v81 = vld [vmem:[#allocation2 + $0x28] sm:$0xff]
  %v82 = vld [vmem:[#allocation2 + $0x30] sm:$0xff]
  %v83 = vld [vmem:[#allocation2 + $0x38] sm:$0xff]
  %v84 = vld [vmem:[#allocation2 + $0x40] sm:$0xff]
  %v85 = vld [vmem:[#allocation2 + $0x48] sm:$0xff]
  %v86 = vld [vmem:[#allocation2 + $0x50] sm:$0xff]
  %v87 = vld [vmem:[#allocation2 + $0x58] sm:$0xff]
  %v88 = vpack.c.bf16 %v79, %v76
  %v89 = vpack.c.bf16 %v80, %v77
  %v90 = vpack.c.bf16 %v81, %v78
  %v91 = vpack.c.bf16 %v85, %v82
  %v92 = vpack.c.bf16 %v86, %v83
  %v93 = vpack.c.bf16 %v87, %v84
  %v94 = vld [vmem:[%s1] sm:$0xf]
  %v95 = vld [vmem:[%s1 + $0x4] sm:$0xf]
  %v96 = vld [vmem:[%s1 + $0x8] sm:$0xf]
  %v97 = vld [vmem:[%s1 + $0xc] sm:$0xf]
  %v98 = vld [vmem:[%s1 + $0x10] sm:$0xf]
  %v99 = vld [vmem:[%s1 + $0x14] sm:$0xf]
  %v100 = vld [vmem:[%s1 + $0x18] sm:$0xf]
  %v101 = vld [vmem:[%s1 + $0x1c] sm:$0xf]
  %v102 = vld [vmem:[%s1 + $0x20] sm:$0xf]
  %v103 = vld [vmem:[%s1 + $0x24] sm:$0xf]
  %v104 = vld [vmem:[%s1 + $0x28] sm:$0xf]
  %v105 = vld [vmem:[%s1 + $0x2c] sm:$0xf]
  %v106 = vld [vmem:[%s1 + $0x30] sm:$0xf]
  %v107 = vld [vmem:[%s1 + $0x34] sm:$0xf]
  %v108 = vld [vmem:[%s1 + $0x38] sm:$0xf]
  %v109 = vld [vmem:[%s1 + $0x3c] sm:$0xf]
  %v110 = vld [vmem:[%s1 + $0x40] sm:$0xf]
  %v111 = vld [vmem:[%s1 + $0x44] sm:$0xf]
  %v112 = vld [vmem:[%s1 + $0x48] sm:$0xf]
  %v113 = vld [vmem:[%s1 + $0x4c] sm:$0xf]
  %v114 = vld [vmem:[%s1 + $0x50] sm:$0xf]
  %v115 = vld [vmem:[%s1 + $0x54] sm:$0xf]
  %v116 = vld [vmem:[%s1 + $0x58] sm:$0xf]
  %v117 = vld [vmem:[%s1 + $0x5c] sm:$0xf]
  %v118 = vld [vmem:[%s1 + $0x60] sm:$0xf]
  %v119 = vld [vmem:[%s1 + $0x64] sm:$0xf]
  %v120 = vld [vmem:[%s1 + $0x68] sm:$0xf]
  %v121 = vld [vmem:[%s1 + $0x6c] sm:$0xf]
  %v122 = vld [vmem:[%s1 + $0x70] sm:$0xf]
  %v123 = vld [vmem:[%s1 + $0x74] sm:$0xf]
  %v124 = vld [vmem:[%s1 + $0x78] sm:$0xf]
  %v125 = vld [vmem:[%s1 + $0x7c] sm:$0xf]
  %v126 = vld [vmem:[%s1 + $0x80] sm:$0xf]
  %v127 = vld [vmem:[%s1 + $0x84] sm:$0xf]
  %v128 = vld [vmem:[%s1 + $0x88] sm:$0xf]
  %v129 = vld [vmem:[%s1 + $0x8c] sm:$0xf]
  %v130 = vld [vmem:[%s1 + $0x90] sm:$0xf]
  %v131 = vld [vmem:[%s1 + $0x94] sm:$0xf]
  %v132 = vld [vmem:[%s1 + $0x98] sm:$0xf]
  %v133 = vld [vmem:[%s1 + $0x9c] sm:$0xf]
  %v134 = vld [vmem:[%s1 + $0xa0] sm:$0xf]
  %v135 = vld [vmem:[%s1 + $0xa4] sm:$0xf]
  %v136 = vld [vmem:[%s1 + $0xa8] sm:$0xf]
  %v137 = vld [vmem:[%s1 + $0xac] sm:$0xf]
  %v138 = vld [vmem:[%s1 + $0xb0] sm:$0xf]
  %v139 = vld [vmem:[%s1 + $0xb4] sm:$0xf]
  %v140 = vld [vmem:[%s1 + $0xb8] sm:$0xf]
  %v141 = vld [vmem:[%s1 + $0xbc] sm:$0xf]
  %v142 = vld [vmem:[%s2] sm:$0x1]
  %v144 = vlaneseq
  %v145 = vshrl.u32 %v144, 7
  %v146 = vsub.s32 0, %v145
  %v147 = vrot.slane %v142, %v146
  %v197 = vunpack.c.l.b16 %v94
  %v198 = vunpack.c.l.b16 %v95
  %v199 = vunpack.c.l.b16 %v96
  %v200 = vunpack.c.l.b16 %v97
  %v201 = vunpack.c.l.b16 %v98
  %v202 = vunpack.c.l.b16 %v99
  %v203 = vunpack.c.l.b16 %v100
  %v204 = vunpack.c.l.b16 %v101
  %v205 = vunpack.c.l.b16 %v102
  %v206 = vunpack.c.l.b16 %v103
  %v207 = vunpack.c.l.b16 %v104
  %v208 = vunpack.c.l.b16 %v105
  %v209 = vunpack.c.l.b16 %v106
  %v210 = vunpack.c.l.b16 %v107
  %v211 = vunpack.c.l.b16 %v108
  %v212 = vunpack.c.l.b16 %v109
  %v213 = vunpack.c.l.b16 %v110
  %v214 = vunpack.c.l.b16 %v111
  %v215 = vunpack.c.l.b16 %v112
  %v216 = vunpack.c.l.b16 %v113
  %v217 = vunpack.c.l.b16 %v114
  %v218 = vunpack.c.l.b16 %v115
  %v219 = vunpack.c.l.b16 %v116
  %v220 = vunpack.c.l.b16 %v117
  %v221 = vunpack.c.l.b16 %v118
  %v222 = vunpack.c.l.b16 %v119
  %v223 = vunpack.c.l.b16 %v120
  %v224 = vunpack.c.l.b16 %v121
  %v225 = vunpack.c.l.b16 %v122
  %v226 = vunpack.c.l.b16 %v123
  %v227 = vunpack.c.l.b16 %v124
  %v228 = vunpack.c.l.b16 %v125
  %v229 = vunpack.c.l.b16 %v126
  %v230 = vunpack.c.l.b16 %v127
  %v231 = vunpack.c.l.b16 %v128
  %v232 = vunpack.c.l.b16 %v129
  %v233 = vunpack.c.l.b16 %v130
  %v234 = vunpack.c.l.b16 %v131
  %v235 = vunpack.c.l.b16 %v132
  %v236 = vunpack.c.l.b16 %v133
  %v237 = vunpack.c.l.b16 %v134
  %v238 = vunpack.c.l.b16 %v135
  %v239 = vunpack.c.l.b16 %v136
  %v240 = vunpack.c.l.b16 %v137
  %v241 = vunpack.c.l.b16 %v138
  %v242 = vunpack.c.l.b16 %v139
  %v243 = vunpack.c.l.b16 %v140
  %v244 = vunpack.c.l.b16 %v141
  %v245 = vpack.c.b16 %v198, %v197
  %v246 = vpack.c.b16 %v200, %v199
  %v247 = vpack.c.b16 %v202, %v201
  %v248 = vpack.c.b16 %v204, %v203
  %v249 = vpack.c.b16 %v206, %v205
  %v250 = vpack.c.b16 %v208, %v207
  %v251 = vpack.c.b16 %v210, %v209
  %v252 = vpack.c.b16 %v212, %v211
  %v253 = vpack.c.b16 %v214, %v213
  %v254 = vpack.c.b16 %v216, %v215
  %v255 = vpack.c.b16 %v218, %v217
  %v256 = vpack.c.b16 %v220, %v219
  %v257 = vpack.c.b16 %v222, %v221
  %v258 = vpack.c.b16 %v224, %v223
  %v259 = vpack.c.b16 %v226, %v225
  %v260 = vpack.c.b16 %v228, %v227
  %v261 = vpack.c.b16 %v230, %v229
  %v262 = vpack.c.b16 %v232, %v231
  %v263 = vpack.c.b16 %v234, %v233
  %v264 = vpack.c.b16 %v236, %v235
  %v265 = vpack.c.b16 %v238, %v237
  %v266 = vpack.c.b16 %v240, %v239
  %v267 = vpack.c.b16 %v242, %v241
  %v268 = vpack.c.b16 %v244, %v243
  %293 = vmatprep.subr.bf16.mxu0 0
  %294 = vmatpush1.bf16.msra.mxu0 %v245
  %295 = vmatprep.subr.bf16.mxu0 0
  %296 = vmatpush1.bf16.msra.mxu0 %v246
  %297 = vmatprep.subr.bf16.mxu0 0
  %298 = vmatpush1.bf16.msra.mxu0 %v247
  %299 = vmatprep.subr.bf16.mxu0 0
  %300 = vmatpush1.bf16.msra.mxu0 %v248
  %301 = vmatprep.subr.bf16.mxu0 0
  %302 = vmatpush1.bf16.msra.mxu0 %v249
  %303 = vmatprep.subr.bf16.mxu0 0
  %304 = vmatpush1.bf16.msra.mxu0 %v250
  %305 = vmatprep.subr.bf16.mxu0 0
  %306 = vmatpush1.bf16.msra.mxu0 %v251
  %307 = vmatprep.subr.bf16.mxu0 0
  %308 = vmatpush1.bf16.msra.mxu0 %v252
  %309 = vmatprep.subr.bf16.mxu0 0
  %310 = vmatpush1.bf16.msra.mxu0 %v253
  %311 = vmatprep.subr.bf16.mxu0 0
  %312 = vmatpush1.bf16.msra.mxu0 %v254
  %313 = vmatprep.subr.bf16.mxu0 0
  %314 = vmatpush1.bf16.msra.mxu0 %v255
  %315 = vmatprep.subr.bf16.mxu0 0
  %316 = vmatpush1.bf16.msra.mxu0 %v256
  %317 = vmatprep.subr.bf16.mxu0 0
  %318 = vmatpush1.bf16.msra.mxu0 %v257
  %319 = vmatprep.subr.bf16.mxu0 0
  %320 = vmatpush1.bf16.msra.mxu0 %v258
  %321 = vmatprep.subr.bf16.mxu0 0
  %322 = vmatpush1.bf16.msra.mxu0 %v259
  %323 = vmatprep.subr.bf16.mxu0 0
  %324 = vmatpush1.bf16.msra.mxu0 %v260
  %325 = vmatprep.mubr.bf16.mxu0 %v89
  %326 = vmatmul.mubr.bf16.gmra.mrb[0].mxu0 %v88
  %v327 = vpop.f32.mrb[0].mxu0
  %v328 = vadd.f32 %v147, %v327
  %v329 = vpop.f32.mrb[0].mxu0
  %v330 = vpop.f32.mrb[0].mxu0
  %v331 = vadd.f32 %v147, %v330
  %v332 = vpop.f32.mrb[0].mxu0
  %333 = vmatprep.mubr.bf16.mxu0 %v92
  %334 = vmatmul.mubr.bf16.gmra.mrb[0].mxu0 %v91
  %v335 = vpop.f32.mrb[0].mxu0
  %v336 = vadd.f32 %v147, %v335
  %v337 = vpop.f32.mrb[0].mxu0
  %v338 = vpop.f32.mrb[0].mxu0
  %v339 = vadd.f32 %v147, %v338
  %v340 = vpop.f32.mrb[0].mxu0
  %341 = vdwg.mxu0
  %342 = vmatprep.subr.bf16.mxu0 0
  %343 = vmatpush1.bf16.msra.mxu0 %v261
  %344 = vmatprep.subr.bf16.mxu0 0
  %345 = vmatpush1.bf16.msra.mxu0 %v262
  %346 = vmatprep.subr.bf16.mxu0 0
  %347 = vmatpush1.bf16.msra.mxu0 %v263
  %348 = vmatprep.subr.bf16.mxu0 0
  %349 = vmatpush1.bf16.msra.mxu0 %v264
  %350 = vmatprep.subr.bf16.mxu0 0
  %351 = vmatpush1.bf16.msra.mxu0 %v265
  %352 = vmatprep.subr.bf16.mxu0 0
  %353 = vmatpush1.bf16.msra.mxu0 %v266
  %354 = vmatprep.subr.bf16.mxu0 0
  %355 = vmatpush1.bf16.msra.mxu0 %v267
  %356 = vmatprep.subr.bf16.mxu0 0
  %357 = vmatpush1.bf16.msra.mxu0 %v268
  %358 = vmatprep.subr.bf16.mxu0 0
  %359 = vmatpush1.bf16.msra.mxu0 0
  %360 = vmatprep.subr.bf16.mxu0 0
  %361 = vmatpush1.bf16.msra.mxu0 0
  %362 = vmatprep.subr.bf16.mxu0 0
  %363 = vmatpush1.bf16.msra.mxu0 0
  %364 = vmatprep.subr.bf16.mxu0 0
  %365 = vmatpush1.bf16.msra.mxu0 0
  %366 = vmatprep.subr.bf16.mxu0 0
  %367 = vmatpush1.bf16.msra.mxu0 0
  %368 = vmatprep.subr.bf16.mxu0 0
  %369 = vmatpush1.bf16.msra.mxu0 0
  %370 = vmatprep.subr.bf16.mxu0 0
  %371 = vmatpush1.bf16.msra.mxu0 0
  %372 = vmatprep.subr.bf16.mxu0 0
  %373 = vmatpush1.bf16.msra.mxu0 0
  %374 = vmatprep.mubr.bf16.mxu0 0
  %375 = vmatmul.mubr.bf16.gmra.mrb[0].mxu0 %v90
  %v376 = vpop.f32.mrb[0].mxu0
  %v377 = vadd.f32 %v328, %v376
  %v378 = vpop.f32.mrb[0].mxu0
  %v379 = vpop.f32.mrb[0].mxu0
  %v380 = vadd.f32 %v331, %v379
  %v381 = vpop.f32.mrb[0].mxu0
  %382 = vmatprep.mubr.bf16.mxu0 0
  %383 = vmatmul.mubr.bf16.gmra.mrb[0].mxu0 %v93
  %v384 = vpop.f32.mrb[0].mxu0
  %v385 = vadd.f32 %v336, %v384
  %v386 = vpop.f32.mrb[0].mxu0
  %v387 = vpop.f32.mrb[0].mxu0
  %v388 = vadd.f32 %v339, %v387
  %v389 = vpop.f32.mrb[0].mxu0
  %390 = vdwg.mxu0
  %391 = vst [vmem:[%s7] sm:$0xff] %v377
  %392 = vst [vmem:[%s7 + $0x8] sm:$0xff] %v380
  %393 = vst [vmem:[%s7 + $0x10] sm:$0xff] %v385
  %394 = vst [vmem:[%s7 + $0x18] sm:$0xff] %v388
  %v395 = vmax.f32 %v377, 0.0
  %v396 = vmax.f32 %v380, 0.0
  %v397 = vmax.f32 %v385, 0.0
  %v398 = vmax.f32 %v388, 0.0
  %399 = vst [vmem:[#allocation2 + $0x8] sm:$0xff] %v395
  %400 = vst [vmem:[#allocation2 + $0x20] sm:$0xff] %v396
  %v403 = vrot.slane %v395, 7
  %v404 = vrot.slane %v396, 7
  %v405 = vsel %vm42, %v403, %v404
  %408 = vst [vmem:[#allocation2] sm:$0xfe] %v403
  %409 = vst [vmem:[#allocation2 + $0x18] sm:$0xff] %v405
  %v410 = vrot.slane %v395, 1
  %v411 = vrot.slane %v396, 1
  %v412 = vsel %vm50, %v410, %v411
  %415 = vst [vmem:[#allocation2 + $0x10] sm:$0xff] %v412
  %416 = vst [vmem:[#allocation2 + $0x28] sm:$0x7f] %v411
  %417 = vst [vmem:[#allocation2 + $0x38] sm:$0xff] %v397
  %418 = vst [vmem:[#allocation2 + $0x50] sm:$0xff] %v398
  %v421 = vrot.slane %v397, 7
  %v422 = vrot.slane %v398, 7
  %v423 = vsel %vm42, %v421, %v422
  %426 = vst [vmem:[#allocation2 + $0x30] sm:$0xfe] %v421
  %427 = vst [vmem:[#allocation2 + $0x48] sm:$0xff] %v423
  %v428 = vrot.slane %v397, 1
  %v429 = vrot.slane %v398, 1
  %v430 = vsel %vm50, %v428, %v429
  %433 = vst [vmem:[#allocation2 + $0x40] sm:$0xff] %v430
  %434 = vst [vmem:[#allocation2 + $0x58] sm:$0x7f] %v429
  %v435 = vld [vmem:[#allocation2] sm:$0xff]
  %v436 = vld [vmem:[#allocation2 + $0x8] sm:$0xff]
  %v437 = vld [vmem:[#allocation2 + $0x10] sm:$0xff]
  %v438 = vld [vmem:[#allocation2 + $0x18] sm:$0xff]
  %v439 = vld [vmem:[#allocation2 + $0x20] sm:$0xff]
  %v440 = vld [vmem:[#allocation2 + $0x28] sm:$0xff]
  %v441 = vld [vmem:[#allocation2 + $0x30] sm:$0xff]
  %v442 = vld [vmem:[#allocation2 + $0x38] sm:$0xff]
  %v443 = vld [vmem:[#allocation2 + $0x40] sm:$0xff]
  %v444 = vld [vmem:[#allocation2 + $0x48] sm:$0xff]
  %v445 = vld [vmem:[#allocation2 + $0x50] sm:$0xff]
  %v446 = vld [vmem:[#allocation2 + $0x58] sm:$0xff]
  %v447 = vpack.c.bf16 %v438, %v435
  %v448 = vpack.c.bf16 %v439, %v436
  %v449 = vpack.c.bf16 %v440, %v437
  %v450 = vpack.c.bf16 %v444, %v441
  %v451 = vpack.c.bf16 %v445, %v442
  %v452 = vpack.c.bf16 %v446, %v443
  %v453 = vld [vmem:[%s3] sm:$0xf]
  %v454 = vld [vmem:[%s3 + $0x4] sm:$0xf]
  %v455 = vld [vmem:[%s3 + $0x8] sm:$0xf]
  %v456 = vld [vmem:[%s3 + $0xc] sm:$0xf]
  %v457 = vld [vmem:[%s3 + $0x10] sm:$0xf]
  %v458 = vld [vmem:[%s3 + $0x14] sm:$0xf]
  %v459 = vld [vmem:[%s3 + $0x18] sm:$0xf]
  %v460 = vld [vmem:[%s3 + $0x1c] sm:$0xf]
  %v461 = vld [vmem:[%s3 + $0x20] sm:$0xf]
  %v462 = vld [vmem:[%s3 + $0x24] sm:$0xf]
  %v463 = vld [vmem:[%s3 + $0x28] sm:$0xf]
  %v464 = vld [vmem:[%s3 + $0x2c] sm:$0xf]
  %v465 = vld [vmem:[%s3 + $0x30] sm:$0xf]
  %v466 = vld [vmem:[%s3 + $0x34] sm:$0xf]
  %v467 = vld [vmem:[%s3 + $0x38] sm:$0xf]
  %v468 = vld [vmem:[%s3 + $0x3c] sm:$0xf]
  %v469 = vld [vmem:[%s3 + $0x40] sm:$0xf]
  %v470 = vld [vmem:[%s3 + $0x44] sm:$0xf]
  %v471 = vld [vmem:[%s3 + $0x48] sm:$0xf]
  %v472 = vld [vmem:[%s3 + $0x4c] sm:$0xf]
  %v473 = vld [vmem:[%s3 + $0x50] sm:$0xf]
  %v474 = vld [vmem:[%s3 + $0x54] sm:$0xf]
  %v475 = vld [vmem:[%s3 + $0x58] sm:$0xf]
  %v476 = vld [vmem:[%s3 + $0x5c] sm:$0xf]
  %v477 = vld [vmem:[%s3 + $0x60] sm:$0xf]
  %v478 = vld [vmem:[%s3 + $0x64] sm:$0xf]
  %v479 = vld [vmem:[%s3 + $0x68] sm:$0xf]
  %v480 = vld [vmem:[%s3 + $0x6c] sm:$0xf]
  %v481 = vld [vmem:[%s3 + $0x70] sm:$0xf]
  %v482 = vld [vmem:[%s3 + $0x74] sm:$0xf]
  %v483 = vld [vmem:[%s3 + $0x78] sm:$0xf]
  %v484 = vld [vmem:[%s3 + $0x7c] sm:$0xf]
  %v485 = vld [vmem:[%s3 + $0x80] sm:$0xf]
  %v486 = vld [vmem:[%s3 + $0x84] sm:$0xf]
  %v487 = vld [vmem:[%s3 + $0x88] sm:$0xf]
  %v488 = vld [vmem:[%s3 + $0x8c] sm:$0xf]
  %v489 = vld [vmem:[%s3 + $0x90] sm:$0xf]
  %v490 = vld [vmem:[%s3 + $0x94] sm:$0xf]
  %v491 = vld [vmem:[%s3 + $0x98] sm:$0xf]
  %v492 = vld [vmem:[%s3 + $0x9c] sm:$0xf]
  %v493 = vld [vmem:[%s3 + $0xa0] sm:$0xf]
  %v494 = vld [vmem:[%s3 + $0xa4] sm:$0xf]
  %v495 = vld [vmem:[%s3 + $0xa8] sm:$0xf]
  %v496 = vld [vmem:[%s3 + $0xac] sm:$0xf]
  %v497 = vld [vmem:[%s3 + $0xb0] sm:$0xf]
  %v498 = vld [vmem:[%s3 + $0xb4] sm:$0xf]
  %v499 = vld [vmem:[%s3 + $0xb8] sm:$0xf]
  %v500 = vld [vmem:[%s3 + $0xbc] sm:$0xf]
  %v501 = vld [vmem:[%s4] sm:$0x1]
  %v503 = vlaneseq
  %v504 = vshrl.u32 %v503, 7
  %v505 = vsub.s32 0, %v504
  %v506 = vrot.slane %v501, %v505
  %v556 = vunpack.c.l.b16 %v453
  %v557 = vunpack.c.l.b16 %v454
  %v558 = vunpack.c.l.b16 %v455
  %v559 = vunpack.c.l.b16 %v456
  %v560 = vunpack.c.l.b16 %v457
  %v561 = vunpack.c.l.b16 %v458
  %v562 = vunpack.c.l.b16 %v459
  %v563 = vunpack.c.l.b16 %v460
  %v564 = vunpack.c.l.b16 %v461
  %v565 = vunpack.c.l.b16 %v462
  %v566 = vunpack.c.l.b16 %v463
  %v567 = vunpack.c.l.b16 %v464
  %v568 = vunpack.c.l.b16 %v465
  %v569 = vunpack.c.l.b16 %v466
  %v570 = vunpack.c.l.b16 %v467
  %v571 = vunpack.c.l.b16 %v468
  %v572 = vunpack.c.l.b16 %v469
  %v573 = vunpack.c.l.b16 %v470
  %v574 = vunpack.c.l.b16 %v471
  %v575 = vunpack.c.l.b16 %v472
  %v576 = vunpack.c.l.b16 %v473
  %v577 = vunpack.c.l.b16 %v474
  %v578 = vunpack.c.l.b16 %v475
  %v579 = vunpack.c.l.b16 %v476
  %v580 = vunpack.c.l.b16 %v477
  %v581 = vunpack.c.l.b16 %v478
  %v582 = vunpack.c.l.b16 %v479
  %v583 = vunpack.c.l.b16 %v480
  %v584 = vunpack.c.l.b16 %v481
  %v585 = vunpack.c.l.b16 %v482
  %v586 = vunpack.c.l.b16 %v483
  %v587 = vunpack.c.l.b16 %v484
  %v588 = vunpack.c.l.b16 %v485
  %v589 = vunpack.c.l.b16 %v486
  %v590 = vunpack.c.l.b16 %v487
  %v591 = vunpack.c.l.b16 %v488
  %v592 = vunpack.c.l.b16 %v489
  %v593 = vunpack.c.l.b16 %v490
  %v594 = vunpack.c.l.b16 %v491
  %v595 = vunpack.c.l.b16 %v492
  %v596 = vunpack.c.l.b16 %v493
  %v597 = vunpack.c.l.b16 %v494
  %v598 = vunpack.c.l.b16 %v495
  %v599 = vunpack.c.l.b16 %v496
  %v600 = vunpack.c.l.b16 %v497
  %v601 = vunpack.c.l.b16 %v498
  %v602 = vunpack.c.l.b16 %v499
  %v603 = vunpack.c.l.b16 %v500
  %v604 = vpack.c.b16 %v557, %v556
  %v605 = vpack.c.b16 %v559, %v558
  %v606 = vpack.c.b16 %v561, %v560
  %v607 = vpack.c.b16 %v563, %v562
  %v608 = vpack.c.b16 %v565, %v564
  %v609 = vpack.c.b16 %v567, %v566
  %v610 = vpack.c.b16 %v569, %v568
  %v611 = vpack.c.b16 %v571, %v570
  %v612 = vpack.c.b16 %v573, %v572
  %v613 = vpack.c.b16 %v575, %v574
  %v614 = vpack.c.b16 %v577, %v576
  %v615 = vpack.c.b16 %v579, %v578
  %v616 = vpack.c.b16 %v581, %v580
  %v617 = vpack.c.b16 %v583, %v582
  %v618 = vpack.c.b16 %v585, %v584
  %v619 = vpack.c.b16 %v587, %v586
  %v620 = vpack.c.b16 %v589, %v588
  %v621 = vpack.c.b16 %v591, %v590
  %v622 = vpack.c.b16 %v593, %v592
  %v623 = vpack.c.b16 %v595, %v594
  %v624 = vpack.c.b16 %v597, %v596
  %v625 = vpack.c.b16 %v599, %v598
  %v626 = vpack.c.b16 %v601, %v600
  %v627 = vpack.c.b16 %v603, %v602
  %652 = vmatprep.subr.bf16.mxu0 0
  %653 = vmatpush1.bf16.msra.mxu0 %v604
  %654 = vmatprep.subr.bf16.mxu0 0
  %655 = vmatpush1.bf16.msra.mxu0 %v605
  %656 = vmatprep.subr.bf16.mxu0 0
  %657 = vmatpush1.bf16.msra.mxu0 %v606
  %658 = vmatprep.subr.bf16.mxu0 0
  %659 = vmatpush1.bf16.msra.mxu0 %v607
  %660 = vmatprep.subr.bf16.mxu0 0
  %661 = vmatpush1.bf16.msra.mxu0 %v608
  %662 = vmatprep.subr.bf16.mxu0 0
  %663 = vmatpush1.bf16.msra.mxu0 %v609
  %664 = vmatprep.subr.bf16.mxu0 0
  %665 = vmatpush1.bf16.msra.mxu0 %v610
  %666 = vmatprep.subr.bf16.mxu0 0
  %667 = vmatpush1.bf16.msra.mxu0 %v611
  %668 = vmatprep.subr.bf16.mxu0 0
  %669 = vmatpush1.bf16.msra.mxu0 %v612
  %670 = vmatprep.subr.bf16.mxu0 0
  %671 = vmatpush1.bf16.msra.mxu0 %v613
  %672 = vmatprep.subr.bf16.mxu0 0
  %673 = vmatpush1.bf16.msra.mxu0 %v614
  %674 = vmatprep.subr.bf16.mxu0 0
  %675 = vmatpush1.bf16.msra.mxu0 %v615
  %676 = vmatprep.subr.bf16.mxu0 0
  %677 = vmatpush1.bf16.msra.mxu0 %v616
  %678 = vmatprep.subr.bf16.mxu0 0
  %679 = vmatpush1.bf16.msra.mxu0 %v617
  %680 = vmatprep.subr.bf16.mxu0 0
  %681 = vmatpush1.bf16.msra.mxu0 %v618
  %682 = vmatprep.subr.bf16.mxu0 0
  %683 = vmatpush1.bf16.msra.mxu0 %v619
  %684 = vmatprep.mubr.bf16.mxu0 %v448
  %685 = vmatmul.mubr.bf16.gmra.mrb[0].mxu0 %v447
  %v686 = vpop.f32.mrb[0].mxu0
  %v687 = vadd.f32 %v506, %v686
  %v688 = vpop.f32.mrb[0].mxu0
  %v689 = vpop.f32.mrb[0].mxu0
  %v690 = vadd.f32 %v506, %v689
  %v691 = vpop.f32.mrb[0].mxu0
  %692 = vmatprep.mubr.bf16.mxu0 %v451
  %693 = vmatmul.mubr.bf16.gmra.mrb[0].mxu0 %v450
  %v694 = vpop.f32.mrb[0].mxu0
  %v695 = vadd.f32 %v506, %v694
  %v696 = vpop.f32.mrb[0].mxu0
  %v697 = vpop.f32.mrb[0].mxu0
  %v698 = vadd.f32 %v506, %v697
  %v699 = vpop.f32.mrb[0].mxu0
  %700 = vdwg.mxu0
  %701 = vmatprep.subr.bf16.mxu0 0
  %702 = vmatpush1.bf16.msra.mxu0 %v620
  %703 = vmatprep.subr.bf16.mxu0 0
  %704 = vmatpush1.bf16.msra.mxu0 %v621
  %705 = vmatprep.subr.bf16.mxu0 0
  %706 = vmatpush1.bf16.msra.mxu0 %v622
  %707 = vmatprep.subr.bf16.mxu0 0
  %708 = vmatpush1.bf16.msra.mxu0 %v623
  %709 = vmatprep.subr.bf16.mxu0 0
  %710 = vmatpush1.bf16.msra.mxu0 %v624
  %711 = vmatprep.subr.bf16.mxu0 0
  %712 = vmatpush1.bf16.msra.mxu0 %v625
  %713 = vmatprep.subr.bf16.mxu0 0
  %714 = vmatpush1.bf16.msra.mxu0 %v626
  %715 = vmatprep.subr.bf16.mxu0 0
  %716 = vmatpush1.bf16.msra.mxu0 %v627
  %717 = vmatprep.subr.bf16.mxu0 0
  %718 = vmatpush1.bf16.msra.mxu0 0
  %719 = vmatprep.subr.bf16.mxu0 0
  %720 = vmatpush1.bf16.msra.mxu0 0
  %721 = vmatprep.subr.bf16.mxu0 0
  %722 = vmatpush1.bf16.msra.mxu0 0
  %723 = vmatprep.subr.bf16.mxu0 0
  %724 = vmatpush1.bf16.msra.mxu0 0
  %725 = vmatprep.subr.bf16.mxu0 0
  %726 = vmatpush1.bf16.msra.mxu0 0
  %727 = vmatprep.subr.bf16.mxu0 0
  %728 = vmatpush1.bf16.msra.mxu0 0
  %729 = vmatprep.subr.bf16.mxu0 0
  %730 = vmatpush1.bf16.msra.mxu0 0
  %731 = vmatprep.subr.bf16.mxu0 0
  %732 = vmatpush1.bf16.msra.mxu0 0
  %733 = vmatprep.mubr.bf16.mxu0 0
  %734 = vmatmul.mubr.bf16.gmra.mrb[0].mxu0 %v449
  %v735 = vpop.f32.mrb[0].mxu0
  %v736 = vadd.f32 %v687, %v735
  %v737 = vpop.f32.mrb[0].mxu0
  %v738 = vpop.f32.mrb[0].mxu0
  %v739 = vadd.f32 %v690, %v738
  %v740 = vpop.f32.mrb[0].mxu0
  %741 = vmatprep.mubr.bf16.mxu0 0
  %742 = vmatmul.mubr.bf16.gmra.mrb[0].mxu0 %v452
  %v743 = vpop.f32.mrb[0].mxu0
  %v744 = vadd.f32 %v695, %v743
  %v745 = vpop.f32.mrb[0].mxu0
  %v746 = vpop.f32.mrb[0].mxu0
  %v747 = vadd.f32 %v698, %v746
  %v748 = vpop.f32.mrb[0].mxu0
  %749 = vdwg.mxu0
  %750 = vst [vmem:[%s8] sm:$0xff] %v736
  %751 = vst [vmem:[%s8 + $0x8] sm:$0xff] %v739
  %752 = vst [vmem:[%s8 + $0x10] sm:$0xff] %v744
  %753 = vst [vmem:[%s8 + $0x18] sm:$0xff] %v747
  %v754 = vmax.f32 %v736, 0.0
  %v755 = vmax.f32 %v739, 0.0
  %v756 = vmax.f32 %v744, 0.0
  %v757 = vmax.f32 %v747, 0.0
  %758 = vst [vmem:[#allocation2 + $0x8] sm:$0xff] %v754
  %759 = vst [vmem:[#allocation2 + $0x20] sm:$0xff] %v755
  %v762 = vrot.slane %v754, 7
  %v763 = vrot.slane %v755, 7
  %v764 = vsel %vm42, %v762, %v763
  %767 = vst [vmem:[#allocation2] sm:$0xfe] %v762
  %768 = vst [vmem:[#allocation2 + $0x18] sm:$0xff] %v764
  %v769 = vrot.slane %v754, 1
  %v770 = vrot.slane %v755, 1
  %v771 = vsel %vm50, %v769, %v770
  %774 = vst [vmem:[#allocation2 + $0x10] sm:$0xff] %v771
  %775 = vst [vmem:[#allocation2 + $0x28] sm:$0x7f] %v770
  %776 = vst [vmem:[#allocation2 + $0x38] sm:$0xff] %v756
  %777 = vst [vmem:[#allocation2 + $0x50] sm:$0xff] %v757
  %v780 = vrot.slane %v756, 7
  %v781 = vrot.slane %v757, 7
  %v782 = vsel %vm42, %v780, %v781
  %785 = vst [vmem:[#allocation2 + $0x30] sm:$0xfe] %v780
  %786 = vst [vmem:[#allocation2 + $0x48] sm:$0xff] %v782
  %v787 = vrot.slane %v756, 1
  %v788 = vrot.slane %v757, 1
  %v789 = vsel %vm50, %v787, %v788
  %792 = vst [vmem:[#allocation2 + $0x40] sm:$0xff] %v789
  %793 = vst [vmem:[#allocation2 + $0x58] sm:$0x7f] %v788
  %v794 = vld [vmem:[#allocation2] sm:$0xff]
  %v795 = vld [vmem:[#allocation2 + $0x8] sm:$0xff]
  %v796 = vld [vmem:[#allocation2 + $0x10] sm:$0xff]
  %v797 = vld [vmem:[#allocation2 + $0x18] sm:$0xff]
  %v798 = vld [vmem:[#allocation2 + $0x20] sm:$0xff]
  %v799 = vld [vmem:[#allocation2 + $0x28] sm:$0xff]
  %v800 = vld [vmem:[#allocation2 + $0x30] sm:$0xff]
  %v801 = vld [vmem:[#allocation2 + $0x38] sm:$0xff]
  %v802 = vld [vmem:[#allocation2 + $0x40] sm:$0xff]
  %v803 = vld [vmem:[#allocation2 + $0x48] sm:$0xff]
  %v804 = vld [vmem:[#allocation2 + $0x50] sm:$0xff]
  %v805 = vld [vmem:[#allocation2 + $0x58] sm:$0xff]
  %v806 = vpack.c.bf16 %v797, %v794
  %v807 = vpack.c.bf16 %v798, %v795
  %v808 = vpack.c.bf16 %v799, %v796
  %v809 = vpack.c.bf16 %v803, %v800
  %v810 = vpack.c.bf16 %v804, %v801
  %v811 = vpack.c.bf16 %v805, %v802
  %v812 = vld [vmem:[%s5] sm:$0xf]
  %v813 = vld [vmem:[%s5 + $0x4] sm:$0xf]
  %v814 = vld [vmem:[%s5 + $0x8] sm:$0xf]
  %v815 = vld [vmem:[%s5 + $0xc] sm:$0xf]
  %v816 = vld [vmem:[%s5 + $0x10] sm:$0xf]
  %v817 = vld [vmem:[%s5 + $0x14] sm:$0xf]
  %v818 = vld [vmem:[%s5 + $0x18] sm:$0xf]
  %v819 = vld [vmem:[%s5 + $0x1c] sm:$0xf]
  %v820 = vld [vmem:[%s5 + $0x20] sm:$0xf]
  %v821 = vld [vmem:[%s5 + $0x24] sm:$0xf]
  %v822 = vld [vmem:[%s5 + $0x28] sm:$0xf]
  %v823 = vld [vmem:[%s5 + $0x2c] sm:$0xf]
  %v824 = vld [vmem:[%s5 + $0x30] sm:$0xf]
  %v825 = vld [vmem:[%s5 + $0x34] sm:$0xf]
  %v826 = vld [vmem:[%s5 + $0x38] sm:$0xf]
  %v827 = vld [vmem:[%s5 + $0x3c] sm:$0xf]
  %v828 = vld [vmem:[%s5 + $0x40] sm:$0xf]
  %v829 = vld [vmem:[%s5 + $0x44] sm:$0xf]
  %v830 = vld [vmem:[%s5 + $0x48] sm:$0xf]
  %v831 = vld [vmem:[%s5 + $0x4c] sm:$0xf]
  %v832 = vld [vmem:[%s5 + $0x50] sm:$0xf]
  %v833 = vld [vmem:[%s5 + $0x54] sm:$0xf]
  %v834 = vld [vmem:[%s5 + $0x58] sm:$0xf]
  %v835 = vld [vmem:[%s5 + $0x5c] sm:$0xf]
  %v836 = vld [vmem:[%s5 + $0x60] sm:$0xf]
  %v837 = vld [vmem:[%s5 + $0x64] sm:$0xf]
  %v838 = vld [vmem:[%s5 + $0x68] sm:$0xf]
  %v839 = vld [vmem:[%s5 + $0x6c] sm:$0xf]
  %v840 = vld [vmem:[%s5 + $0x70] sm:$0xf]
  %v841 = vld [vmem:[%s5 + $0x74] sm:$0xf]
  %v842 = vld [vmem:[%s5 + $0x78] sm:$0xf]
  %v843 = vld [vmem:[%s5 + $0x7c] sm:$0xf]
  %v844 = vld [vmem:[%s5 + $0x80] sm:$0xf]
  %v845 = vld [vmem:[%s5 + $0x84] sm:$0xf]
  %v846 = vld [vmem:[%s5 + $0x88] sm:$0xf]
  %v847 = vld [vmem:[%s5 + $0x8c] sm:$0xf]
  %v848 = vld [vmem:[%s5 + $0x90] sm:$0xf]
  %v849 = vld [vmem:[%s5 + $0x94] sm:$0xf]
  %v850 = vld [vmem:[%s5 + $0x98] sm:$0xf]
  %v851 = vld [vmem:[%s5 + $0x9c] sm:$0xf]
  %v852 = vld [vmem:[%s5 + $0xa0] sm:$0xf]
  %v853 = vld [vmem:[%s5 + $0xa4] sm:$0xf]
  %v854 = vld [vmem:[%s5 + $0xa8] sm:$0xf]
  %v855 = vld [vmem:[%s5 + $0xac] sm:$0xf]
  %v856 = vld [vmem:[%s5 + $0xb0] sm:$0xf]
  %v857 = vld [vmem:[%s5 + $0xb4] sm:$0xf]
  %v858 = vld [vmem:[%s5 + $0xb8] sm:$0xf]
  %v859 = vld [vmem:[%s5 + $0xbc] sm:$0xf]
  %v860 = vld [vmem:[%s6] sm:$0x1]
  %v862 = vlaneseq
  %v863 = vshrl.u32 %v862, 7
  %v864 = vsub.s32 0, %v863
  %v865 = vrot.slane %v860, %v864
  %v915 = vunpack.c.l.b16 %v812
  %v916 = vunpack.c.l.b16 %v813
  %v917 = vunpack.c.l.b16 %v814
  %v918 = vunpack.c.l.b16 %v815
  %v919 = vunpack.c.l.b16 %v816
  %v920 = vunpack.c.l.b16 %v817
  %v921 = vunpack.c.l.b16 %v818
  %v922 = vunpack.c.l.b16 %v819
  %v923 = vunpack.c.l.b16 %v820
  %v924 = vunpack.c.l.b16 %v821
  %v925 = vunpack.c.l.b16 %v822
  %v926 = vunpack.c.l.b16 %v823
  %v927 = vunpack.c.l.b16 %v824
  %v928 = vunpack.c.l.b16 %v825
  %v929 = vunpack.c.l.b16 %v826
  %v930 = vunpack.c.l.b16 %v827
  %v931 = vunpack.c.l.b16 %v828
  %v932 = vunpack.c.l.b16 %v829
  %v933 = vunpack.c.l.b16 %v830
  %v934 = vunpack.c.l.b16 %v831
  %v935 = vunpack.c.l.b16 %v832
  %v936 = vunpack.c.l.b16 %v833
  %v937 = vunpack.c.l.b16 %v834
  %v938 = vunpack.c.l.b16 %v835
  %v939 = vunpack.c.l.b16 %v836
  %v940 = vunpack.c.l.b16 %v837
  %v941 = vunpack.c.l.b16 %v838
  %v942 = vunpack.c.l.b16 %v839
  %v943 = vunpack.c.l.b16 %v840
  %v944 = vunpack.c.l.b16 %v841
  %v945 = vunpack.c.l.b16 %v842
  %v946 = vunpack.c.l.b16 %v843
  %v947 = vunpack.c.l.b16 %v844
  %v948 = vunpack.c.l.b16 %v845
  %v949 = vunpack.c.l.b16 %v846
  %v950 = vunpack.c.l.b16 %v847
  %v951 = vunpack.c.l.b16 %v848
  %v952 = vunpack.c.l.b16 %v849
  %v953 = vunpack.c.l.b16 %v850
  %v954 = vunpack.c.l.b16 %v851
  %v955 = vunpack.c.l.b16 %v852
  %v956 = vunpack.c.l.b16 %v853
  %v957 = vunpack.c.l.b16 %v854
  %v958 = vunpack.c.l.b16 %v855
  %v959 = vunpack.c.l.b16 %v856
  %v960 = vunpack.c.l.b16 %v857
  %v961 = vunpack.c.l.b16 %v858
  %v962 = vunpack.c.l.b16 %v859
  %v963 = vpack.c.b16 %v916, %v915
  %v964 = vpack.c.b16 %v918, %v917
  %v965 = vpack.c.b16 %v920, %v919
  %v966 = vpack.c.b16 %v922, %v921
  %v967 = vpack.c.b16 %v924, %v923
  %v968 = vpack.c.b16 %v926, %v925
  %v969 = vpack.c.b16 %v928, %v927
  %v970 = vpack.c.b16 %v930, %v929
  %v971 = vpack.c.b16 %v932, %v931
  %v972 = vpack.c.b16 %v934, %v933
  %v973 = vpack.c.b16 %v936, %v935
  %v974 = vpack.c.b16 %v938, %v937
  %v975 = vpack.c.b16 %v940, %v939
  %v976 = vpack.c.b16 %v942, %v941
  %v977 = vpack.c.b16 %v944, %v943
  %v978 = vpack.c.b16 %v946, %v945
  %v979 = vpack.c.b16 %v948, %v947
  %v980 = vpack.c.b16 %v950, %v949
  %v981 = vpack.c.b16 %v952, %v951
  %v982 = vpack.c.b16 %v954, %v953
  %v983 = vpack.c.b16 %v956, %v955
  %v984 = vpack.c.b16 %v958, %v957
  %v985 = vpack.c.b16 %v960, %v959
  %v986 = vpack.c.b16 %v962, %v961
  %1011 = vmatprep.subr.bf16.mxu0 0
  %1012 = vmatpush1.bf16.msra.mxu0 %v963
  %1013 = vmatprep.subr.bf16.mxu0 0
  %1014 = vmatpush1.bf16.msra.mxu0 %v964
  %1015 = vmatprep.subr.bf16.mxu0 0
  %1016 = vmatpush1.bf16.msra.mxu0 %v965
  %1017 = vmatprep.subr.bf16.mxu0 0
  %1018 = vmatpush1.bf16.msra.mxu0 %v966
  %1019 = vmatprep.subr.bf16.mxu0 0
  %1020 = vmatpush1.bf16.msra.mxu0 %v967
  %1021 = vmatprep.subr.bf16.mxu0 0
  %1022 = vmatpush1.bf16.msra.mxu0 %v968
  %1023 = vmatprep.subr.bf16.mxu0 0
  %1024 = vmatpush1.bf16.msra.mxu0 %v969
  %1025 = vmatprep.subr.bf16.mxu0 0
  %1026 = vmatpush1.bf16.msra.mxu0 %v970
  %1027 = vmatprep.subr.bf16.mxu0 0
  %1028 = vmatpush1.bf16.msra.mxu0 %v971
  %1029 = vmatprep.subr.bf16.mxu0 0
  %1030 = vmatpush1.bf16.msra.mxu0 %v972
  %1031 = vmatprep.subr.bf16.mxu0 0
  %1032 = vmatpush1.bf16.msra.mxu0 %v973
  %1033 = vmatprep.subr.bf16.mxu0 0
  %1034 = vmatpush1.bf16.msra.mxu0 %v974
  %1035 = vmatprep.subr.bf16.mxu0 0
  %1036 = vmatpush1.bf16.msra.mxu0 %v975
  %1037 = vmatprep.subr.bf16.mxu0 0
  %1038 = vmatpush1.bf16.msra.mxu0 %v976
  %1039 = vmatprep.subr.bf16.mxu0 0
  %1040 = vmatpush1.bf16.msra.mxu0 %v977
  %1041 = vmatprep.subr.bf16.mxu0 0
  %1042 = vmatpush1.bf16.msra.mxu0 %v978
  %1043 = vmatprep.mubr.bf16.mxu0 %v807
  %1044 = vmatmul.mubr.bf16.gmra.mrb[0].mxu0 %v806
  %v1045 = vpop.f32.mrb[0].mxu0
  %v1046 = vadd.f32 %v865, %v1045
  %v1047 = vpop.f32.mrb[0].mxu0
  %v1048 = vpop.f32.mrb[0].mxu0
  %v1049 = vadd.f32 %v865, %v1048
  %v1050 = vpop.f32.mrb[0].mxu0
  %1051 = vmatprep.mubr.bf16.mxu0 %v810
  %1052 = vmatmul.mubr.bf16.gmra.mrb[0].mxu0 %v809
  %v1053 = vpop.f32.mrb[0].mxu0
  %v1054 = vadd.f32 %v865, %v1053
  %v1055 = vpop.f32.mrb[0].mxu0
  %v1056 = vpop.f32.mrb[0].mxu0
  %v1057 = vadd.f32 %v865, %v1056
  %v1058 = vpop.f32.mrb[0].mxu0
  %1059 = vdwg.mxu0
  %1060 = vmatprep.subr.bf16.mxu0 0
  %1061 = vmatpush1.bf16.msra.mxu0 %v979
  %1062 = vmatprep.subr.bf16.mxu0 0
  %1063 = vmatpush1.bf16.msra.mxu0 %v980
  %1064 = vmatprep.subr.bf16.mxu0 0
  %1065 = vmatpush1.bf16.msra.mxu0 %v981
  %1066 = vmatprep.subr.bf16.mxu0 0
  %1067 = vmatpush1.bf16.msra.mxu0 %v982
  %1068 = vmatprep.subr.bf16.mxu0 0
  %1069 = vmatpush1.bf16.msra.mxu0 %v983
  %1070 = vmatprep.subr.bf16.mxu0 0
  %1071 = vmatpush1.bf16.msra.mxu0 %v984
  %1072 = vmatprep.subr.bf16.mxu0 0
  %1073 = vmatpush1.bf16.msra.mxu0 %v985
  %1074 = vmatprep.subr.bf16.mxu0 0
  %1075 = vmatpush1.bf16.msra.mxu0 %v986
  %1076 = vmatprep.subr.bf16.mxu0 0
  %1077 = vmatpush1.bf16.msra.mxu0 0
  %1078 = vmatprep.subr.bf16.mxu0 0
  %1079 = vmatpush1.bf16.msra.mxu0 0
  %1080 = vmatprep.subr.bf16.mxu0 0
  %1081 = vmatpush1.bf16.msra.mxu0 0
  %1082 = vmatprep.subr.bf16.mxu0 0
  %1083 = vmatpush1.bf16.msra.mxu0 0
  %1084 = vmatprep.subr.bf16.mxu0 0
  %1085 = vmatpush1.bf16.msra.mxu0 0
  %1086 = vmatprep.subr.bf16.mxu0 0
  %1087 = vmatpush1.bf16.msra.mxu0 0
  %1088 = vmatprep.subr.bf16.mxu0 0
  %1089 = vmatpush1.bf16.msra.mxu0 0
  %1090 = vmatprep.subr.bf16.mxu0 0
  %1091 = vmatpush1.bf16.msra.mxu0 0
  %1092 = vmatprep.mubr.bf16.mxu0 0
  %1093 = vmatmul.mubr.bf16.gmra.mrb[0].mxu0 %v808
  %v1094 = vpop.f32.mrb[0].mxu0
  %v1095 = vadd.f32 %v1046, %v1094
  %v1096 = vpop.f32.mrb[0].mxu0
  %v1097 = vpop.f32.mrb[0].mxu0
  %v1098 = vadd.f32 %v1049, %v1097
  %v1099 = vpop.f32.mrb[0].mxu0
  %1100 = vmatprep.mubr.bf16.mxu0 0
  %1101 = vmatmul.mubr.bf16.gmra.mrb[0].mxu0 %v811
  %v1102 = vpop.f32.mrb[0].mxu0
  %v1103 = vadd.f32 %v1054, %v1102
  %v1104 = vpop.f32.mrb[0].mxu0
  %v1105 = vpop.f32.mrb[0].mxu0
  %v1106 = vadd.f32 %v1057, %v1105
  %v1107 = vpop.f32.mrb[0].mxu0
  %1108 = vdwg.mxu0
  %1109 = vst [vmem:[%s9] sm:$0xff] %v1095
  %1110 = vst [vmem:[%s9 + $0x8] sm:$0xff] %v1098
  %1111 = vst [vmem:[%s9 + $0x10] sm:$0xff] %v1103
  %1112 = vst [vmem:[%s9 + $0x18] sm:$0xff] %v1106
  // Predicated region
  $region30: #{_forward_impl.1} parent=0 // pred_check
    _
  $region31: #{_forward_impl.1} parent=0 // pred_check_branch
    %1114 = sbr.rel (0) target = $region33
  $region32: #{_forward_impl.1} parent=0 // pred_region
    _
  $region33: #{_forward_impl.1} parent=0 // pred_fallthru
    _
  // Predicated region
  $region34: #{_forward_impl.1} parent=0 // pred_check
    _
  $region35: #{_forward_impl.1} parent=0 // pred_check_branch
    %1116 = sbr.rel (0) target = $region37
  $region36: #{_forward_impl.1} parent=0 // pred_region
    _
  $region37: #{_forward_impl.1} parent=0 // pred_fallthru
    _
  // Predicated region
  $region38: #{_forward_impl.1} parent=0 // pred_check
    _
  $region39: #{_forward_impl.1} parent=0 // pred_check_branch
    %1118 = sbr.rel (0) target = $region41
  $region40: #{_forward_impl.1} parent=0 // pred_region
    _
  $region41: #{_forward_impl.1} parent=0 // pred_fallthru
    _
  // Predicated region
  $region42: #{_forward_impl.1} parent=0 // pred_check
    _
  $region43: #{_forward_impl.1} parent=0 // pred_check_branch
    %1120 = sbr.rel (0) target = $region45
  $region44: #{_forward_impl.1} parent=0 // pred_region
    _
  $region45: #{_forward_impl.1} parent=0 // pred_fallthru
    _
  // Predicated region
  $region46: #{_forward_impl.1} parent=0 // pred_check
    _
  $region47: #{_forward_impl.1} parent=0 // pred_check_branch
    %1122 = sbr.rel (0) target = $region49
  $region48: #{_forward_impl.1} parent=0 // pred_region
    _
  $region49: #{_forward_impl.1} parent=0 // pred_fallthru
    _
  // Predicated region
  $region50: #{_forward_impl.1} parent=0 // pred_check
    _
  $region51: #{_forward_impl.1} parent=0 // pred_check_branch
    %1124 = sbr.rel (0) target = $region53
  $region52: #{_forward_impl.1} parent=0 // pred_region
    _
  $region53: #{_forward_impl.1} parent=0 // pred_fallthru
    _

</llo_original>
